<compile_context>
chip_gen: v7x
topology: tpu7x:2x2x1
jax: 0.10.0
libtpu: 0.0.40
codegen_flags: <defaults>
</compile_context>

<pallas_src>
import functools

import jax
import jax.numpy as jnp
from jax.experimental import pallas as pl
from jax.experimental.pallas import tpu as pltpu


def _tcn_kernel(x_ref, w1_ref, w3_ref, b3_ref, pvec_ref, slope_ref, o_ref, *,
                kernel_size, dilation, pad, eps, t_true, conv_channels,
                use_bf16_matmul):
    C = conv_channels
    Tp = x_ref.shape[-1]                      # padded (lane-dense) time extent
    inv_n = jnp.float32(1.0 / (C * t_true))   # gLN averages over the TRUE T

    # Lane index / validity mask for the padded time axis.
    lane = jax.lax.broadcasted_iota(jnp.int32, (C, Tp), 1)
    valid = lane < t_true

    mm_dtype = jnp.bfloat16 if use_bf16_matmul else jnp.float32

    # ---- 1x1 conv (MXU matmul over channels) --------------------------------
    y = jnp.dot(w1_ref[...], x_ref[...].astype(mm_dtype),
                preferred_element_type=jnp.float32)          # (C, Tp) f32

    # Packed per-channel params: cols [b1, g1, be1, bd, g2, be2, wd_0..wd_K-1]
    b1 = pvec_ref[:, 0:1]
    g1 = pvec_ref[:, 1:2]
    be1 = pvec_ref[:, 2:3]
    bd = pvec_ref[:, 3:4]
    g2 = pvec_ref[:, 4:5]
    be2 = pvec_ref[:, 5:6]
    a1 = slope_ref[0]                          # PReLU slopes from SMEM
    a2 = slope_ref[1]

    # ---- bias + PReLU 1; zero padded lanes (keeps gLN stats exact) ----------
    y = y + b1
    y = jnp.where(y >= 0, y, a1 * y)
    y = jnp.where(valid, y, 0.0)

    # ---- GlobalLayerNorm 1: fused single-pass statistics ---------------------
    s1 = jnp.sum(y)
    q1 = jnp.sum(y * y)
    mean1 = s1 * inv_n
    var1 = q1 * inv_n - mean1 * mean1
    rstd1 = jax.lax.rsqrt(var1 + eps)
    y = g1 * ((y - mean1) * rstd1) + be1
    # Padded lanes must be exactly zero so the rolls below reproduce the
    # implicit zero padding of the PyTorch depthwise Conv1d.
    y = jnp.where(valid, y, 0.0)

    # ---- depthwise conv: XLU rolls + boundary masks (no padded copy) ---------
    acc = jnp.zeros((C, Tp), jnp.float32)
    for k in range(kernel_size):                       # static unroll
        off = k * dilation - pad                       # tap offset in time
        wk = pvec_ref[:, 6 + k:7 + k]                  # (C, 1) tap weight
        if off == 0:
            tap = y
        else:
            tap = pltpu.roll(y, shift=(-off) % Tp, axis=1)   # tap[t] = y[t+off]
            if off < 0:      # left taps: first -off lanes come from zero pad
                tap = jnp.where(lane >= -off, tap, 0.0)
            else:            # right taps: lanes >= T-off come from zero pad
                tap = jnp.where(lane < t_true - off, tap, 0.0)
        acc = acc + wk * tap
    y = acc + bd

    # ---- PReLU 2 + GlobalLayerNorm 2 (fused statistics) ----------------------
    y = jnp.where(y >= 0, y, a2 * y)
    y = jnp.where(valid, y, 0.0)
    s2 = jnp.sum(y)
    q2 = jnp.sum(y * y)
    mean2 = s2 * inv_n
    var2 = q2 * inv_n - mean2 * mean2
    rstd2 = jax.lax.rsqrt(var2 + eps)
    y = g2 * ((y - mean2) * rstd2) + be2

    # ---- 1x1 conv back to in_channels + bias + residual ----------------------
    out = jnp.dot(w3_ref[...], y.astype(mm_dtype),
                  preferred_element_type=jnp.float32)        # (C_in, Tp)
    out = out + b3_ref[...]
    out = out + x_ref[...].astype(jnp.float32)   # re-read x: short live range
    o_ref[...] = out.astype(o_ref.dtype)


def tcn_block_pallas(x, params, *, kernel_size=3, dilation=1, eps=1e-5,
                     use_bf16_matmul=True):
    """Non-causal TCNBlock forward.  x: [N, C_in, T] float32."""
    (w1, b1, a1, g1, be1, wd, bd, a2, g2, be2, w3, b3) = params
    N, C_in, T = x.shape
    C = w1.shape[0]
    pad = dilation * (kernel_size - 1) // 2

    # Lane-dense time axis: pad T to a multiple of 128 with zeros.  Padded
    # lanes are masked inside the kernel (gLN stats over true T only).
    Tp = ((T + 127) // 128) * 128
    x_in = jnp.pad(x, ((0, 0), (0, 0), (0, Tp - T))) if Tp != T else x

    mm_dtype = jnp.bfloat16 if use_bf16_matmul else jnp.float32
    w1c = w1.astype(mm_dtype)
    w3c = w3.astype(mm_dtype)

    # Pack every (C,1) per-channel vector plus the depthwise taps into one
    # block; PReLU slopes go to SMEM.
    pvec = jnp.concatenate([b1, g1, be1, bd, g2, be2, wd], axis=1)  # (C, 6+K)
    slopes = jnp.concatenate([a1.reshape(-1), a2.reshape(-1)])       # (2,)

    kernel = functools.partial(
        _tcn_kernel, kernel_size=kernel_size, dilation=dilation, pad=pad,
        eps=eps, t_true=T, conv_channels=C, use_bf16_matmul=use_bf16_matmul)

    full = lambda shape: pl.BlockSpec(shape, lambda n: (0,) * len(shape))
    grid_spec = pltpu.PrefetchScalarGridSpec(
        num_scalar_prefetch=0,
        grid=(N,),
        in_specs=[
            pl.BlockSpec((None, C_in, Tp), lambda n: (n, 0, 0)),   # x (per batch)
            full((C, C_in)),                                       # w1
            full((C_in, C)),                                       # w3
            full((C_in, 1)),                                       # b3
            full((C, 6 + kernel_size)),                            # packed per-channel params
            pl.BlockSpec(memory_space=pltpu.MemorySpace.SMEM),     # PReLU slopes
        ],
        out_specs=pl.BlockSpec((None, C_in, Tp), lambda n: (n, 0, 0)),
    )

    flops = int(N * (4 * C * C_in * Tp + (2 * kernel_size + 16) * C * Tp))
    bytes_accessed = int(
        4 * N * C_in * Tp * 2
        + 2 * C * C_in * (2 if use_bf16_matmul else 4)
        + 4 * (C * (6 + kernel_size) + C_in + 2))
    # VMEM budget sized for the block; capped so it also fits v7x (64 MiB).
    # TODO(synk): for very long T on v7x, tile T with sum/sumsq gLN accumulators.
    est_vmem = 4 * (4 * C_in * Tp + 8 * C * Tp) + 8 * C * (6 + kernel_size)
    vmem_limit = int(min(64 * 1024 * 1024, max(32 * 1024 * 1024, est_vmem)))

    out = pl.pallas_call(
        kernel,
        out_shape=jax.ShapeDtypeStruct((N, C_in, Tp), x.dtype),
        grid_spec=grid_spec,
        compiler_params=pltpu.CompilerParams(
            dimension_semantics=("parallel",),
            vmem_limit_bytes=vmem_limit),
        cost_estimate=pl.CostEstimate(
            flops=flops, transcendentals=2 * N, bytes_accessed=bytes_accessed),
    )(x_in, w1c, w3c, b3, pvec, slopes)

    return out[:, :, :T] if Tp != T else out


def tcn_block_ref(x, params, *, kernel_size=3, dilation=1, eps=1e-5):
    """Pure-JAX reference matching the PyTorch forward (non-causal)."""
    (w1, b1, a1, g1, be1, wd, bd, a2, g2, be2, w3, b3) = params
    N, C_in, T = x.shape
    pad = dilation * (kernel_size - 1) // 2

    def gln(y, g, be):
        m = jnp.mean(y, axis=(1, 2), keepdims=True)
        v = jnp.mean((y - m) ** 2, axis=(1, 2), keepdims=True)
        return g[None] * (y - m) / jnp.sqrt(v + eps) + be[None]

    y = jnp.einsum('oc,nct->not', w1, x) + b1[None]
    y = jnp.where(y >= 0, y, a1[0, 0] * y)
    y = gln(y, g1, be1)
    ypad = jnp.pad(y, ((0, 0), (0, 0), (pad, pad)))
    acc = jnp.zeros_like(y)
    for k in range(kernel_size):
        acc = acc + wd[None, :, k:k + 1] * ypad[:, :, k * dilation:k * dilation + T]
    y = acc + bd[None]
    y = jnp.where(y >= 0, y, a2[0, 0] * y)
    y = gln(y, g2, be2)
    out = jnp.einsum('oc,nct->not', w3, y) + b3[None]
    return out + x


def init_params(key, in_channels, conv_channels, kernel_size):
    ks = jax.random.split(key, 6)
    w1 = 0.1 * jax.random.normal(ks[0], (conv_channels, in_channels), jnp.float32)
    b1 = 0.1 * jax.random.normal(ks[1], (conv_channels, 1), jnp.float32)
    a1 = jnp.full((1, 1), 0.25, jnp.float32)          # PReLU default init
    g1 = jnp.ones((conv_channels, 1), jnp.float32)    # gLN gamma
    be1 = jnp.zeros((conv_channels, 1), jnp.float32)  # gLN beta
    wd = 0.1 * jax.random.normal(ks[2], (conv_channels, kernel_size), jnp.float32)
    bd = 0.1 * jax.random.normal(ks[3], (conv_channels, 1), jnp.float32)
    a2 = jnp.full((1, 1), 0.25, jnp.float32)
    g2 = jnp.ones((conv_channels, 1), jnp.float32)
    be2 = jnp.zeros((conv_channels, 1), jnp.float32)
    w3 = 0.1 * jax.random.normal(ks[4], (in_channels, conv_channels), jnp.float32)
    b3 = 0.1 * jax.random.normal(ks[5], (in_channels, 1), jnp.float32)
    return (w1, b1, a1, g1, be1, wd, bd, a2, g2, be2, w3, b3)


if __name__ == "__main__":
    # Small shapes consistent with the module's [N, C_in, L_in] input.
    # T=200 (non-multiple of 128) exercises lane padding / boundary masking;
    # dilation=2 exercises the dilated depthwise taps.
    N, C_in, C, T, K, DIL = 2, 16, 32, 200, 3, 2

    key = jax.random.PRNGKey(0)
    kx, kp = jax.random.split(key)
    x = jax.random.normal(kx, (N, C_in, T), jnp.float32)
    params = init_params(kp, C_in, C, K)

    ref = tcn_block_ref(x, params, kernel_size=K, dilation=DIL)

    # Exact-precision (f32 MXU) path: tight check vs PyTorch-equivalent reference.
    out_f32 = tcn_block_pallas(x, params, kernel_size=K, dilation=DIL,
                               use_bf16_matmul=False)
    out_f32 = jax.block_until_ready(out_f32)
    assert out_f32.shape == (N, C_in, T)
    assert jnp.allclose(out_f32, ref, atol=1e-4, rtol=1e-4), "f32 path mismatch"

    # Default perf path: bf16 MXU matmuls with f32 accumulation (looser tol).
    out_bf16 = tcn_block_pallas(x, params, kernel_size=K, dilation=DIL,
                                use_bf16_matmul=True)
    out_bf16 = jax.block_until_ready(out_bf16)
    assert out_bf16.shape == (N, C_in, T)
    assert jnp.allclose(out_bf16, ref, atol=5e-2, rtol=5e-2), "bf16 path mismatch"

    print("KERNEL_OK")
</pallas_src>

<mosaic_0001>
module attributes {stable_mosaic.version = 11 : i64} {
  func.func @_tcn_kernel(%arg0: i32, %arg1: memref<1x16x256xf32, #tpu.memory_space<vmem>>, %arg2: memref<32x16xf32, #tpu.memory_space<vmem>>, %arg3: memref<16x32xf32, #tpu.memory_space<vmem>>, %arg4: memref<16x1xf32, #tpu.memory_space<vmem>>, %arg5: memref<32x9xf32, #tpu.memory_space<vmem>>, %arg6: memref<2xf32, #tpu.memory_space<smem>>, %arg7: memref<1x16x256xf32, #tpu.memory_space<vmem>>) attributes {dimension_semantics = [#tpu.dimension_semantics<parallel>], iteration_bounds = array<i64: 2>, scalar_prefetch = 0 : i64, scratch_operands = 0 : i64, tpu.core_type = #tpu.core_type<tc>, window_params = [{transform_indices = @transform_0, window_bounds = array<i64: 1, 16, 256>}, {pipeline_mode = #tpu.pipeline_mode<synchronous>, transform_indices = @transform_1, window_bounds = array<i64: 32, 16>}, {pipeline_mode = #tpu.pipeline_mode<synchronous>, transform_indices = @transform_2, window_bounds = array<i64: 16, 32>}, {pipeline_mode = #tpu.pipeline_mode<synchronous>, transform_indices = @transform_3, window_bounds = array<i64: 16, 1>}, {pipeline_mode = #tpu.pipeline_mode<synchronous>, transform_indices = @transform_4, window_bounds = array<i64: 32, 9>}, {transform_indices = @transform_5, window_bounds = array<i64: 2>}, {transform_indices = @transform_6, window_bounds = array<i64: 1, 16, 256>}]} {
    %0 = tpu.iota {dimensions = array<i32: 1>} : vector<32x256xi32>
    %c200_i32 = arith.constant 200 : i32
    %1 = vector.broadcast %c200_i32 : i32 to vector<32x256xi32>
    %2 = arith.cmpi slt, %0, %1 : vector<32x256xi32>
    %c0 = arith.constant 0 : index
    %c0_0 = arith.constant 0 : index
    %3 = vector.load %arg2[%c0, %c0_0] : memref<32x16xf32, #tpu.memory_space<vmem>>, vector<32x16xf32>
    %c0_1 = arith.constant 0 : index
    %c0_2 = arith.constant 0 : index
    %c0_3 = arith.constant 0 : index
    %4 = vector.load %arg1[%c0_1, %c0_2, %c0_3] : memref<1x16x256xf32, #tpu.memory_space<vmem>>, vector<1x16x256xf32>
    %5 = vector.shape_cast %4 : vector<1x16x256xf32> to vector<16x256xf32>
    %cst = arith.constant dense<0.000000e+00> : vector<32x256xf32>
    %6 = tpu.matmul %3, %5, %cst {dimension_numbers = #tpu.dot_dimension_numbers<[1], [0], [0], [1], [0, 0, 1, 1], [], []>} : vector<32x16xf32>, vector<16x256xf32>, vector<32x256xf32> -> vector<32x256xf32>
    %c0_4 = arith.constant 0 : index
    %c0_5 = arith.constant 0 : index
    %7 = vector.load %arg5[%c0_4, %c0_5] : memref<32x9xf32, #tpu.memory_space<vmem>>, vector<32x1xf32>
    %c0_6 = arith.constant 0 : index
    %c1 = arith.constant 1 : index
    %8 = vector.load %arg5[%c0_6, %c1] : memref<32x9xf32, #tpu.memory_space<vmem>>, vector<32x1xf32>
    %c0_7 = arith.constant 0 : index
    %c2 = arith.constant 2 : index
    %9 = vector.load %arg5[%c0_7, %c2] : memref<32x9xf32, #tpu.memory_space<vmem>>, vector<32x1xf32>
    %c0_8 = arith.constant 0 : index
    %c3 = arith.constant 3 : index
    %10 = vector.load %arg5[%c0_8, %c3] : memref<32x9xf32, #tpu.memory_space<vmem>>, vector<32x1xf32>
    %c0_9 = arith.constant 0 : index
    %c4 = arith.constant 4 : index
    %11 = vector.load %arg5[%c0_9, %c4] : memref<32x9xf32, #tpu.memory_space<vmem>>, vector<32x1xf32>
    %c0_10 = arith.constant 0 : index
    %c5 = arith.constant 5 : index
    %12 = vector.load %arg5[%c0_10, %c5] : memref<32x9xf32, #tpu.memory_space<vmem>>, vector<32x1xf32>
    %c0_11 = arith.constant 0 : index
    %13 = memref.load %arg6[%c0_11] : memref<2xf32, #tpu.memory_space<smem>>
    %c1_12 = arith.constant 1 : index
    %14 = memref.load %arg6[%c1_12] : memref<2xf32, #tpu.memory_space<smem>>
    %15 = vector.broadcast %7 : vector<32x1xf32> to vector<32x256xf32>
    %16 = arith.addf %6, %15 : vector<32x256xf32>
    %cst_13 = arith.constant 0.000000e+00 : f32
    %17 = vector.broadcast %cst_13 : f32 to vector<32x256xf32>
    %18 = arith.cmpf oge, %16, %17 : vector<32x256xf32>
    %19 = vector.broadcast %13 : f32 to vector<32x256xf32>
    %20 = arith.mulf %19, %16 : vector<32x256xf32>
    %21 = arith.select %18, %16, %20 : vector<32x256xi1>, vector<32x256xf32>
    %cst_14 = arith.constant 0.000000e+00 : f32
    %22 = vector.broadcast %cst_14 : f32 to vector<32x256xf32>
    %23 = arith.select %2, %21, %22 : vector<32x256xi1>, vector<32x256xf32>
    %24 = vector.shape_cast %23 : vector<32x256xf32> to vector<1x32x256xf32>
    %cst_15 = arith.constant dense<0.000000e+00> : vector<1xf32>
    %25 = vector.multi_reduction <add>, %24, %cst_15 [1, 2] : vector<1x32x256xf32> to vector<1xf32>
    %26 = vector.shape_cast %25 : vector<1xf32> to vector<1x1x1xf32>
    %27 = vector.extract %26[0, 0, 0] : f32 from vector<1x1x1xf32>
    %28 = arith.mulf %23, %23 : vector<32x256xf32>
    %29 = vector.shape_cast %28 : vector<32x256xf32> to vector<1x32x256xf32>
    %cst_16 = arith.constant dense<0.000000e+00> : vector<1xf32>
    %30 = vector.multi_reduction <add>, %29, %cst_16 [1, 2] : vector<1x32x256xf32> to vector<1xf32>
    %31 = vector.shape_cast %30 : vector<1xf32> to vector<1x1x1xf32>
    %32 = vector.extract %31[0, 0, 0] : f32 from vector<1x1x1xf32>
    %cst_17 = arith.constant 1.562500e-04 : f32
    %33 = arith.mulf %27, %cst_17 : f32
    %cst_18 = arith.constant 1.562500e-04 : f32
    %34 = arith.mulf %32, %cst_18 : f32
    %35 = arith.mulf %33, %33 : f32
    %36 = arith.subf %34, %35 : f32
    %cst_19 = arith.constant 9.99999974E-6 : f32
    %37 = arith.addf %36, %cst_19 : f32
    %38 = math.rsqrt %37 : f32
    %39 = vector.broadcast %33 : f32 to vector<32x256xf32>
    %40 = arith.subf %23, %39 : vector<32x256xf32>
    %41 = vector.broadcast %38 : f32 to vector<32x256xf32>
    %42 = arith.mulf %40, %41 : vector<32x256xf32>
    %43 = vector.broadcast %8 : vector<32x1xf32> to vector<32x256xf32>
    %44 = arith.mulf %43, %42 : vector<32x256xf32>
    %45 = vector.broadcast %9 : vector<32x1xf32> to vector<32x256xf32>
    %46 = arith.addf %44, %45 : vector<32x256xf32>
    %cst_20 = arith.constant 0.000000e+00 : f32
    %47 = vector.broadcast %cst_20 : f32 to vector<32x256xf32>
    %48 = arith.select %2, %46, %47 : vector<32x256xi1>, vector<32x256xf32>
    %cst_21 = arith.constant 0.000000e+00 : f32
    %49 = vector.broadcast %cst_21 : f32 to vector<32x256xf32>
    %c0_22 = arith.constant 0 : index
    %c6 = arith.constant 6 : index
    %50 = vector.load %arg5[%c0_22, %c6] : memref<32x9xf32, #tpu.memory_space<vmem>>, vector<32x1xf32>
    %c2_i32 = arith.constant 2 : i32
    %51 = tpu.dynamic_rotate %48 by %c2_i32 dim 1 : vector<32x256xf32>, i32 -> vector<32x256xf32>
    %c2_i32_23 = arith.constant 2 : i32
    %52 = vector.broadcast %c2_i32_23 : i32 to vector<32x256xi32>
    %53 = arith.cmpi sge, %0, %52 : vector<32x256xi32>
    %cst_24 = arith.constant 0.000000e+00 : f32
    %54 = vector.broadcast %cst_24 : f32 to vector<32x256xf32>
    %55 = arith.select %53, %51, %54 : vector<32x256xi1>, vector<32x256xf32>
    %56 = vector.broadcast %50 : vector<32x1xf32> to vector<32x256xf32>
    %57 = arith.mulf %56, %55 : vector<32x256xf32>
    %58 = arith.addf %49, %57 : vector<32x256xf32>
    %c0_25 = arith.constant 0 : index
    %c7 = arith.constant 7 : index
    %59 = vector.load %arg5[%c0_25, %c7] : memref<32x9xf32, #tpu.memory_space<vmem>>, vector<32x1xf32>
    %60 = vector.broadcast %59 : vector<32x1xf32> to vector<32x256xf32>
    %61 = arith.mulf %60, %48 : vector<32x256xf32>
    %62 = arith.addf %58, %61 : vector<32x256xf32>
    %c0_26 = arith.constant 0 : index
    %c8 = arith.constant 8 : index
    %63 = vector.load %arg5[%c0_26, %c8] : memref<32x9xf32, #tpu.memory_space<vmem>>, vector<32x1xf32>
    %c254_i32 = arith.constant 254 : i32
    %64 = tpu.dynamic_rotate %48 by %c254_i32 dim 1 : vector<32x256xf32>, i32 -> vector<32x256xf32>
    %c198_i32 = arith.constant 198 : i32
    %65 = vector.broadcast %c198_i32 : i32 to vector<32x256xi32>
    %66 = arith.cmpi slt, %0, %65 : vector<32x256xi32>
    %cst_27 = arith.constant 0.000000e+00 : f32
    %67 = vector.broadcast %cst_27 : f32 to vector<32x256xf32>
    %68 = arith.select %66, %64, %67 : vector<32x256xi1>, vector<32x256xf32>
    %69 = vector.broadcast %63 : vector<32x1xf32> to vector<32x256xf32>
    %70 = arith.mulf %69, %68 : vector<32x256xf32>
    %71 = arith.addf %62, %70 : vector<32x256xf32>
    %72 = vector.broadcast %10 : vector<32x1xf32> to vector<32x256xf32>
    %73 = arith.addf %71, %72 : vector<32x256xf32>
    %cst_28 = arith.constant 0.000000e+00 : f32
    %74 = vector.broadcast %cst_28 : f32 to vector<32x256xf32>
    %75 = arith.cmpf oge, %73, %74 : vector<32x256xf32>
    %76 = vector.broadcast %14 : f32 to vector<32x256xf32>
    %77 = arith.mulf %76, %73 : vector<32x256xf32>
    %78 = arith.select %75, %73, %77 : vector<32x256xi1>, vector<32x256xf32>
    %cst_29 = arith.constant 0.000000e+00 : f32
    %79 = vector.broadcast %cst_29 : f32 to vector<32x256xf32>
    %80 = arith.select %2, %78, %79 : vector<32x256xi1>, vector<32x256xf32>
    %81 = vector.shape_cast %80 : vector<32x256xf32> to vector<1x32x256xf32>
    %cst_30 = arith.constant dense<0.000000e+00> : vector<1xf32>
    %82 = vector.multi_reduction <add>, %81, %cst_30 [1, 2] : vector<1x32x256xf32> to vector<1xf32>
    %83 = vector.shape_cast %82 : vector<1xf32> to vector<1x1x1xf32>
    %84 = vector.extract %83[0, 0, 0] : f32 from vector<1x1x1xf32>
    %85 = arith.mulf %80, %80 : vector<32x256xf32>
    %86 = vector.shape_cast %85 : vector<32x256xf32> to vector<1x32x256xf32>
    %cst_31 = arith.constant dense<0.000000e+00> : vector<1xf32>
    %87 = vector.multi_reduction <add>, %86, %cst_31 [1, 2] : vector<1x32x256xf32> to vector<1xf32>
    %88 = vector.shape_cast %87 : vector<1xf32> to vector<1x1x1xf32>
    %89 = vector.extract %88[0, 0, 0] : f32 from vector<1x1x1xf32>
    %cst_32 = arith.constant 1.562500e-04 : f32
    %90 = arith.mulf %84, %cst_32 : f32
    %cst_33 = arith.constant 1.562500e-04 : f32
    %91 = arith.mulf %89, %cst_33 : f32
    %92 = arith.mulf %90, %90 : f32
    %93 = arith.subf %91, %92 : f32
    %cst_34 = arith.constant 9.99999974E-6 : f32
    %94 = arith.addf %93, %cst_34 : f32
    %95 = math.rsqrt %94 : f32
    %96 = vector.broadcast %90 : f32 to vector<32x256xf32>
    %97 = arith.subf %80, %96 : vector<32x256xf32>
    %98 = vector.broadcast %95 : f32 to vector<32x256xf32>
    %99 = arith.mulf %97, %98 : vector<32x256xf32>
    %100 = vector.broadcast %11 : vector<32x1xf32> to vector<32x256xf32>
    %101 = arith.mulf %100, %99 : vector<32x256xf32>
    %102 = vector.broadcast %12 : vector<32x1xf32> to vector<32x256xf32>
    %103 = arith.addf %101, %102 : vector<32x256xf32>
    %c0_35 = arith.constant 0 : index
    %c0_36 = arith.constant 0 : index
    %104 = vector.load %arg3[%c0_35, %c0_36] : memref<16x32xf32, #tpu.memory_space<vmem>>, vector<16x32xf32>
    %cst_37 = arith.constant dense<0.000000e+00> : vector<16x256xf32>
    %105 = tpu.matmul %104, %103, %cst_37 {dimension_numbers = #tpu.dot_dimension_numbers<[1], [0], [0], [1], [0, 0, 1, 1], [], []>} : vector<16x32xf32>, vector<32x256xf32>, vector<16x256xf32> -> vector<16x256xf32>
    %c0_38 = arith.constant 0 : index
    %c0_39 = arith.constant 0 : index
    %106 = vector.load %arg4[%c0_38, %c0_39] : memref<16x1xf32, #tpu.memory_space<vmem>>, vector<16x1xf32>
    %107 = vector.broadcast %106 : vector<16x1xf32> to vector<16x256xf32>
    %108 = arith.addf %105, %107 : vector<16x256xf32>
    %c0_40 = arith.constant 0 : index
    %c0_41 = arith.constant 0 : index
    %c0_42 = arith.constant 0 : index
    %109 = vector.load %arg1[%c0_40, %c0_41, %c0_42] : memref<1x16x256xf32, #tpu.memory_space<vmem>>, vector<1x16x256xf32>
    %110 = vector.shape_cast %109 : vector<1x16x256xf32> to vector<16x256xf32>
    %111 = arith.addf %108, %110 : vector<16x256xf32>
    %c0_43 = arith.constant 0 : index
    %c0_44 = arith.constant 0 : index
    %c0_45 = arith.constant 0 : index
    %112 = vector.load %arg7[%c0_43, %c0_44, %c0_45] : memref<1x16x256xf32, #tpu.memory_space<vmem>>, vector<1x16x256xf32>
    %113 = vector.shape_cast %112 : vector<1x16x256xf32> to vector<16x256xf32>
    %114 = vector.shape_cast %111 : vector<16x256xf32> to vector<1x16x256xf32>
    tpu.vector_store %arg7[%c0_43, %c0_44, %c0_45], %114 {strides = array<i32>} : memref<1x16x256xf32, #tpu.memory_space<vmem>>, vector<1x16x256xf32>,
    return
  }
  func.func @transform_0(%arg0: i32) -> (i32, i32, i32) {
    %c0_i32 = arith.constant 0 : i32
    %c0_i32_0 = arith.constant 0 : i32
    %c0_i32_1 = arith.constant 0 : i32
    return %arg0, %c0_i32, %c0_i32_0 : i32, i32, i32
  }
  func.func @transform_1(%arg0: i32) -> (i32, i32) {
    %c0_i32 = arith.constant 0 : i32
    %c0_i32_0 = arith.constant 0 : i32
    %c0_i32_1 = arith.constant 0 : i32
    return %c0_i32, %c0_i32_0 : i32, i32
  }
  func.func @transform_2(%arg0: i32) -> (i32, i32) {
    %c0_i32 = arith.constant 0 : i32
    %c0_i32_0 = arith.constant 0 : i32
    %c0_i32_1 = arith.constant 0 : i32
    return %c0_i32, %c0_i32_0 : i32, i32
  }
  func.func @transform_3(%arg0: i32) -> (i32, i32) {
    %c0_i32 = arith.constant 0 : i32
    %c0_i32_0 = arith.constant 0 : i32
    %c0_i32_1 = arith.constant 0 : i32
    return %c0_i32, %c0_i32_0 : i32, i32
  }
  func.func @transform_4(%arg0: i32) -> (i32, i32) {
    %c0_i32 = arith.constant 0 : i32
    %c0_i32_0 = arith.constant 0 : i32
    %c0_i32_1 = arith.constant 0 : i32
    return %c0_i32, %c0_i32_0 : i32, i32
  }
  func.func @transform_5(%arg0: i32) -> i32 {
    %c0_i32 = arith.constant 0 : i32
    %c0_i32_0 = arith.constant 0 : i32
    return %c0_i32 : i32
  }
  func.func @transform_6(%arg0: i32) -> (i32, i32, i32) {
    %c0_i32 = arith.constant 0 : i32
    %c0_i32_0 = arith.constant 0 : i32
    %c0_i32_1 = arith.constant 0 : i32
    return %arg0, %c0_i32, %c0_i32_0 : i32, i32, i32
  }
}

</mosaic_0001>

<llo_original>
// kernel: tpu_custom_call.1
$region0: #{tpu_custom_call.1}
  #allocation0 [shape = 'u32[]', space=smem, size = 0x4, offset = 0x4, fixed_abs, tag = 'smem constant byte address 0x4 - core index']
  #allocation1 [shape = 'u32[144,128]{1,0:T(1,128)}', space=vmem, size = 0x12000, scoped, tag = 'internal scratch']
  %s0 = inlined_call_operand.vmem [shape: f32[2,16,256], index: 0, kind: input, shape index: {}]
  %s1 = inlined_call_operand.vmem [shape: f32[32,16], index: 1, kind: input, shape index: {}]
  %s2 = inlined_call_operand.vmem [shape: f32[16,32], index: 2, kind: input, shape index: {}]
  %s3 = inlined_call_operand.vmem [shape: f32[16,1], index: 3, kind: input, shape index: {}]
  %s4 = inlined_call_operand.vmem [shape: f32[32,9], index: 4, kind: input, shape index: {}]
  %s5 = inlined_call_operand.vmem [shape: f32[2], index: 5, kind: input, shape index: {}]
  %s6 = inlined_call_operand.hbm [shape: f32[2,16,256], index: 6, kind: output, shape index: {}]
  %s7 = sld [smem:[#allocation0]]
  $region61: #{tpu_custom_call.1} parent=0
    _
  %s9 = ssub.s32 1, %s7
  %s10 = scalar_select 0, %s9, %s7
  $region1: #{tpu_custom_call.1} parent=0
    #allocation2 [shape = 'u8[512]{0}', space=smem, size = 0x200, scoped, tag = 'input window, operand 5, single buffered']
    #allocation3 [shape = 's32[2]{0}', space=sflag, size = 0x8, scoped, tag = 'scoped memory for tpu_custom_call.1']
    #allocation4 [shape = 's32[2]{0}', space=sflag, size = 0x8, scoped, tag = 'scoped memory for tpu_custom_call.1']
    #allocation5 [shape = 'u8[32768]{0}', space=vmem, size = 0x8000, scoped, tag = 'output window, operand 0']
    %11 = vsyncpa [#allocation4], 0
    %12 = vsyncpa [#allocation3], 0
    %s13 = scalar_lea.sflag [#allocation3], 1
    %14 = vsyncpa %s13, 0
    loop: start=0, step=1, limit=4
    $region2: #{tpu_custom_call.1} parent=1 // loop_pre_header
      _
    $region3: #{tpu_custom_call.1} parent=1 // loop_header
      %s16 = sphi 0, %s20
      %p17 = scmp.ge.s32.totalorder %s16, 4
      %s26 = sphi 0, %s28
      %s29 = sphi 0, %s26
      %s30 = sphi 0, %s29
      %s46 = sphi 0, %s30
      %s50 = sphi 0, %s50
      %s52 = sphi 0, %s50
      %s53 = sphi 0, %s52
      %s67 = sphi 0, %s53
      %s71 = sphi 0, %s71
      %s73 = sphi 0, %s71
      %s74 = sphi 0, %s73
      %s88 = sphi 0, %s74
      %s92 = sphi 0, %s92
      %s94 = sphi 0, %s92
      %s95 = sphi 0, %s94
      %s109 = sphi 0, %s95
      %s113 = sphi 0, %s113
      %s115 = sphi 0, %s113
      %s116 = sphi 0, %s115
      %s130 = sphi 0, %s116
      %s134 = sphi 0, %s134
      %s136 = sphi 0, %s134
      %s137 = sphi 0, %s136
      %s151 = sphi 0, %s137
      %s157 = sphi 0, %s159
      %s160 = sphi 0, %s157
      %s161 = sphi 0, %s160
      %s177 = sphi 0, %s161
    $region4: #{tpu_custom_call.1} parent=1 // loop_header_branch
      %19 = sbr.rel (%p17) target = $region8
    $region5: #{tpu_custom_call.1} parent=1 // loop_body
      %s21 = ssub.s32 %s16, 1
      %s22 = ssub.s32 %s16, 2
      %s23 = sadd.s32 %s16, 1
      %s24 = ssub.s32 %s16, %s23
      %p25 = scmp.eq.s32.totalorder %s24, 0
      %s27 = sadd.s32 %s26, 1
      %s28 = scalar_select %p25, %s26, %s27
      %p31 = pneg %p25
      %p32 = scmp.eq.s32.totalorder %s16, 1
      %p33 = por %p31, %p32
      %p34 = scmp.ne.s32.totalorder %s26, %s29
      %p35 = scmp.eq.s32.totalorder %s16, 0
      %p36 = por %p34, %p35
      %p37 = scmp.ne.s32.totalorder %s26, %s29
      %p38 = scmp.eq.s32.totalorder %s21, 1
      %p39 = por %p37, %p38
      %p40 = scmp.ne.s32.totalorder %s29, %s30
      %p41 = scmp.eq.s32.totalorder %s21, 0
      %p42 = por %p40, %p41
      %p43 = scmp.ne.s32.totalorder %s29, %s30
      %p44 = scmp.eq.s32.totalorder %s22, 1
      %p45 = por %p43, %p44
      %p47 = scmp.ne.s32.totalorder %s30, %s46
      %p48 = scmp.eq.s32.totalorder %s22, 0
      %p49 = por %p47, %p48
      %s51 = sadd.s32 %s50, 1
      %p54 = scmp.eq.s32.totalorder %s16, 1
      %p55 = scmp.ne.s32.totalorder %s50, %s52
      %p56 = scmp.eq.s32.totalorder %s16, 0
      %p57 = por %p55, %p56
      %p58 = scmp.ne.s32.totalorder %s50, %s52
      %p59 = scmp.eq.s32.totalorder %s21, 1
      %p60 = por %p58, %p59
      %p61 = scmp.ne.s32.totalorder %s52, %s53
      %p62 = scmp.eq.s32.totalorder %s21, 0
      %p63 = por %p61, %p62
      %p64 = scmp.ne.s32.totalorder %s52, %s53
      %p65 = scmp.eq.s32.totalorder %s22, 1
      %p66 = por %p64, %p65
      %p68 = scmp.ne.s32.totalorder %s53, %s67
      %p69 = scmp.eq.s32.totalorder %s22, 0
      %p70 = por %p68, %p69
      %s72 = sadd.s32 %s71, 1
      %p75 = scmp.eq.s32.totalorder %s16, 1
      %p76 = scmp.ne.s32.totalorder %s71, %s73
      %p77 = scmp.eq.s32.totalorder %s16, 0
      %p78 = por %p76, %p77
      %p79 = scmp.ne.s32.totalorder %s71, %s73
      %p80 = scmp.eq.s32.totalorder %s21, 1
      %p81 = por %p79, %p80
      %p82 = scmp.ne.s32.totalorder %s73, %s74
      %p83 = scmp.eq.s32.totalorder %s21, 0
      %p84 = por %p82, %p83
      %p85 = scmp.ne.s32.totalorder %s73, %s74
      %p86 = scmp.eq.s32.totalorder %s22, 1
      %p87 = por %p85, %p86
      %p89 = scmp.ne.s32.totalorder %s74, %s88
      %p90 = scmp.eq.s32.totalorder %s22, 0
      %p91 = por %p89, %p90
      %s93 = sadd.s32 %s92, 1
      %p96 = scmp.eq.s32.totalorder %s16, 1
      %p97 = scmp.ne.s32.totalorder %s92, %s94
      %p98 = scmp.eq.s32.totalorder %s16, 0
      %p99 = por %p97, %p98
      %p100 = scmp.ne.s32.totalorder %s92, %s94
      %p101 = scmp.eq.s32.totalorder %s21, 1
      %p102 = por %p100, %p101
      %p103 = scmp.ne.s32.totalorder %s94, %s95
      %p104 = scmp.eq.s32.totalorder %s21, 0
      %p105 = por %p103, %p104
      %p106 = scmp.ne.s32.totalorder %s94, %s95
      %p107 = scmp.eq.s32.totalorder %s22, 1
      %p108 = por %p106, %p107
      %p110 = scmp.ne.s32.totalorder %s95, %s109
      %p111 = scmp.eq.s32.totalorder %s22, 0
      %p112 = por %p110, %p111
      %s114 = sadd.s32 %s113, 1
      %p117 = scmp.eq.s32.totalorder %s16, 1
      %p118 = scmp.ne.s32.totalorder %s113, %s115
      %p119 = scmp.eq.s32.totalorder %s16, 0
      %p120 = por %p118, %p119
      %p121 = scmp.ne.s32.totalorder %s113, %s115
      %p122 = scmp.eq.s32.totalorder %s21, 1
      %p123 = por %p121, %p122
      %p124 = scmp.ne.s32.totalorder %s115, %s116
      %p125 = scmp.eq.s32.totalorder %s21, 0
      %p126 = por %p124, %p125
      %p127 = scmp.ne.s32.totalorder %s115, %s116
      %p128 = scmp.eq.s32.totalorder %s22, 1
      %p129 = por %p127, %p128
      %p131 = scmp.ne.s32.totalorder %s116, %s130
      %p132 = scmp.eq.s32.totalorder %s22, 0
      %p133 = por %p131, %p132
      %s135 = sadd.s32 %s134, 1
      %p138 = scmp.eq.s32.totalorder %s16, 1
      %p139 = scmp.ne.s32.totalorder %s134, %s136
      %p140 = scmp.eq.s32.totalorder %s16, 0
      %p141 = por %p139, %p140
      %p142 = scmp.ne.s32.totalorder %s134, %s136
      %p143 = scmp.eq.s32.totalorder %s21, 1
      %p144 = por %p142, %p143
      %p145 = scmp.ne.s32.totalorder %s136, %s137
      %p146 = scmp.eq.s32.totalorder %s21, 0
      %p147 = por %p145, %p146
      %p148 = scmp.ne.s32.totalorder %s136, %s137
      %p149 = scmp.eq.s32.totalorder %s22, 1
      %p150 = por %p148, %p149
      %p152 = scmp.ne.s32.totalorder %s137, %s151
      %p153 = scmp.eq.s32.totalorder %s22, 0
      %p154 = por %p152, %p153
      %s155 = ssub.s32 %s16, %s23
      %p156 = scmp.eq.s32.totalorder %s155, 0
      %s158 = sadd.s32 %s157, 1
      %s159 = scalar_select %p156, %s157, %s158
      %p162 = pneg %p156
      %p163 = scmp.eq.s32.totalorder %s16, 1
      %p164 = por %p162, %p163
      %p165 = scmp.ne.s32.totalorder %s157, %s160
      %p166 = scmp.eq.s32.totalorder %s16, 0
      %p167 = por %p165, %p166
      %p168 = scmp.ne.s32.totalorder %s157, %s160
      %p169 = scmp.eq.s32.totalorder %s21, 1
      %p170 = por %p168, %p169
      %p171 = scmp.ne.s32.totalorder %s160, %s161
      %p172 = scmp.eq.s32.totalorder %s21, 0
      %p173 = por %p171, %p172
      %p174 = scmp.ne.s32.totalorder %s160, %s161
      %p175 = scmp.eq.s32.totalorder %s22, 1
      %p176 = por %p174, %p175
      %p178 = scmp.ne.s32.totalorder %s161, %s177
      %p179 = scmp.eq.s32.totalorder %s22, 0
      %p180 = por %p178, %p179
      %p181 = scmp.le.s32.totalorder 1, %s16
      %p182 = scmp.lt.s32.totalorder %s16, 3
      %p183 = pnand %p181, %p182
      %p184 = pneg %p183
      // Predicated region
      $region9: #{tpu_custom_call.1} parent=5 // pred_check
        _
      $region10: #{tpu_custom_call.1} parent=5 // pred_check_branch
        %186 = sbr.rel (%p183) target = $region12
      $region11: #{tpu_custom_call.1} parent=5 // pred_region
        %s187 = ssub.s32 %s16, 1
        // Predicated region
        $region13: #{tpu_custom_call.1} parent=11 // pred_check
          %p188 = pneg %p63
        $region14: #{tpu_custom_call.1} parent=11 // pred_check_branch
          %190 = sbr.rel (%p188) target = $region16
        $region15: #{tpu_custom_call.1} parent=11 // pred_region
          _
        $region16: #{tpu_custom_call.1} parent=11 // pred_fallthru
          _
        // Predicated region
        $region17: #{tpu_custom_call.1} parent=11 // pred_check
          %p191 = pneg %p84
        $region18: #{tpu_custom_call.1} parent=11 // pred_check_branch
          %193 = sbr.rel (%p191) target = $region20
        $region19: #{tpu_custom_call.1} parent=11 // pred_region
          _
        $region20: #{tpu_custom_call.1} parent=11 // pred_fallthru
          _
        // Predicated region
        $region21: #{tpu_custom_call.1} parent=11 // pred_check
          %p194 = pneg %p105
        $region22: #{tpu_custom_call.1} parent=11 // pred_check_branch
          %196 = sbr.rel (%p194) target = $region24
        $region23: #{tpu_custom_call.1} parent=11 // pred_region
          _
        $region24: #{tpu_custom_call.1} parent=11 // pred_fallthru
          _
        // Predicated region
        $region25: #{tpu_custom_call.1} parent=11 // pred_check
          %p197 = pneg %p126
        $region26: #{tpu_custom_call.1} parent=11 // pred_check_branch
          %199 = sbr.rel (%p197) target = $region28
        $region27: #{tpu_custom_call.1} parent=11 // pred_region
          _
        $region28: #{tpu_custom_call.1} parent=11 // pred_fallthru
          _
        // Predicated region
        $region29: #{tpu_custom_call.1} parent=11 // pred_check
          %p200 = pneg %p147
        $region30: #{tpu_custom_call.1} parent=11 // pred_check_branch
          %202 = sbr.rel (%p200) target = $region32
        $region31: #{tpu_custom_call.1} parent=11 // pred_region
          %s204 = ssub.s32 16, 16
          %205 = vsyncadd [#allocation4], %s204
          %s207 = sshll.u32 %s5, 4
          %s208 = int_to_ptr.vmem [resolvable:$true] %s207
          %210 = dma.vmem_to_smem %s208, 16, [#allocation2], [#allocation4]
        $region32: #{tpu_custom_call.1} parent=11 // pred_fallthru
          _
      $region12: #{tpu_custom_call.1} parent=5 // pred_fallthru
        _
      %p211 = scmp.lt.s32.totalorder %s16, 2
      // Predicated region
      $region33: #{tpu_custom_call.1} parent=5 // pred_check
        %p212 = pneg %p211
      $region34: #{tpu_custom_call.1} parent=5 // pred_check_branch
        %214 = sbr.rel (%p212) target = $region36
      $region35: #{tpu_custom_call.1} parent=5 // pred_region
        // Predicated region
        $region37: #{tpu_custom_call.1} parent=35 // pred_check
          %p215 = pneg %p36
        $region38: #{tpu_custom_call.1} parent=35 // pred_check_branch
          %217 = sbr.rel (%p215) target = $region40
        $region39: #{tpu_custom_call.1} parent=35 // pred_region
          %p218 = scmp.lt.s32.totalorder %s16, 1
          %s219 = scalar_select %p218, %s16, 1
          %s220 = smul.addr %s219, 4
          %s221 = smul.addr %s220, 8
          %s222 = scalar_lea.vmem %s0, %s221
        $region40: #{tpu_custom_call.1} parent=35 // pred_fallthru
          _
      $region36: #{tpu_custom_call.1} parent=5 // pred_fallthru
        _
      %p223 = scmp.le.s32.totalorder 1, %s16
      %p224 = scmp.lt.s32.totalorder %s16, 3
      %p225 = pnand %p223, %p224
      %p226 = pneg %p225
      // Predicated region
      $region41: #{tpu_custom_call.1} parent=5 // pred_check
        _
      $region42: #{tpu_custom_call.1} parent=5 // pred_check_branch
        %228 = sbr.rel (%p225) target = $region44
      $region43: #{tpu_custom_call.1} parent=5 // pred_region
        %s229 = ssub.s32 %s16, 1
        // Predicated region
        $region45: #{tpu_custom_call.1} parent=43 // pred_check
          %p230 = pneg %p147
        $region46: #{tpu_custom_call.1} parent=43 // pred_check_branch
          %232 = sbr.rel (%p230) target = $region48
        $region47: #{tpu_custom_call.1} parent=43 // pred_region
          %233 = dma.done [#allocation4], 16
        $region48: #{tpu_custom_call.1} parent=43 // pred_fallthru
          _
        %234 = sfence
        %p235 = scmp.lt.s32.totalorder %s21, 1
        %s236 = scalar_select %p235, %s21, 1
        %s237 = smul.addr %s236, 4
        %s238 = smul.addr %s237, 8
        %s239 = scalar_lea.vmem %s0, %s238
        %p240 = pneg %p42
        %p241 = pneg %p39
        %p242 = pneg %p63
        %p243 = pneg %p60
        %p244 = pneg %p84
        %p245 = pneg %p81
        %p246 = pneg %p105
        %p247 = pneg %p102
        %p248 = pneg %p126
        %p249 = pneg %p123
        %p250 = pneg %p147
        %p251 = pneg %p144
        %p252 = pneg %p173
        %p253 = pneg %p170
        %s254 = sand.u32 %s160, 1
        %s255 = scalar_lea.sflag [#allocation3], %s254
        %s256 = sand.u32 %s160, 1
        %s257 = smul.addr %s256, 32
        %s258 = scalar_lea.vmem [#allocation5], %s257
        %p259 = scmp.lt.s32.totalorder %s21, 1
        %s260 = scalar_select %p259, %s21, 1
        %s261 = smul.addr %s260, 4
        %s262 = smul.addr %s261, 8
        %s263 = scalar_lea.vmem %s0, %s262
        %v264 = vlaneseq
        %v265 = vand.u32 %v264, 127
        %v266 = vadd.s32 %v265, 128
        %vm267 = vcmp.lt.s32.totalorder %v265, 200
        %vm268 = vcmp.lt.s32.totalorder %v266, 200
        %v269 = vld [vmem:[%s1] sm:$0xff]
        %v270 = vld [vmem:[%s1 + $0x8] sm:$0xff]
        %v271 = vld [vmem:[%s1 + $0x10] sm:$0xff]
        %v272 = vld [vmem:[%s1 + $0x18] sm:$0xff]
        %v273 = vld [vmem:[%s263] sm:$0xff]
        %v274 = vld [vmem:[%s263 + $0x8] sm:$0xff]
        %v275 = vld [vmem:[%s263 + $0x10] sm:$0xff]
        %v276 = vld [vmem:[%s263 + $0x18] sm:$0xff]
        %v277 = vld [vmem:[%s4] sm:$0xff]
        %v278 = vld [vmem:[%s4 + $0x8] sm:$0xff]
        %v279 = vld [vmem:[%s4 + $0x10] sm:$0xff]
        %v280 = vld [vmem:[%s4 + $0x18] sm:$0xff]
        %s281 = sld [smem:[#allocation2]]
        %s282 = sld [smem:[#allocation2 + $0x1]]
        %284 = vset.pattern.permute.xlu0 0
        %285 = vperm.xlu0 %284, %v277
        %v286 = vpop.permute.xlu0 %285
        %289 = vset.pattern.permute.xlu0 0
        %290 = vperm.xlu0 %289, %v278
        %v291 = vpop.permute.xlu0 %290
        %294 = vset.pattern.permute.xlu0 0
        %295 = vperm.xlu0 %294, %v279
        %v296 = vpop.permute.xlu0 %295
        %299 = vset.pattern.permute.xlu0 0
        %300 = vperm.xlu0 %299, %v280
        %v301 = vpop.permute.xlu0 %300
        %vm303 = vcmask 130048
        %v305 = vsel %vm303, %v269, 0
        %v308 = vsel %vm303, %v270, 0
        %v311 = vsel %vm303, %v271, 0
        %v314 = vsel %vm303, %v272, 0
        %316 = vmatprep.subr.mxu0 %v274
        %317 = vmatpush1.msra.mxu0 %v273
        %318 = vmatprep.subr.mxu0 %v276
        %319 = vmatpush1.msra.mxu0 %v275
        %320 = vmatprep.subr.mxu0 0.0
        %321 = vmatpush1.msra.mxu0 0.0
        %322 = vmatprep.subr.mxu0 0.0
        %323 = vmatpush1.msra.mxu0 0.0
        %324 = vmatprep.subr.mxu0 0.0
        %325 = vmatpush1.msra.mxu0 0.0
        %326 = vmatprep.subr.mxu0 0.0
        %327 = vmatpush1.msra.mxu0 0.0
        %328 = vmatprep.subr.mxu0 0.0
        %329 = vmatpush1.msra.mxu0 0.0
        %330 = vmatprep.subr.mxu0 0.0
        %331 = vmatpush1.msra.mxu0 0.0
        %332 = vmatprep.subr.mxu0 0.0
        %333 = vmatpush1.msra.mxu0 0.0
        %334 = vmatprep.subr.mxu0 0.0
        %335 = vmatpush1.msra.mxu0 0.0
        %336 = vmatprep.subr.mxu0 0.0
        %337 = vmatpush1.msra.mxu0 0.0
        %338 = vmatprep.subr.mxu0 0.0
        %339 = vmatpush1.msra.mxu0 0.0
        %340 = vmatprep.subr.mxu0 0.0
        %341 = vmatpush1.msra.mxu0 0.0
        %342 = vmatprep.subr.mxu0 0.0
        %343 = vmatpush1.msra.mxu0 0.0
        %344 = vmatprep.subr.mxu0 0.0
        %345 = vmatpush1.msra.mxu0 0.0
        %346 = vmatprep.subr.mxu0 0.0
        %347 = vmatpush1.msra.mxu0 0.0
        %348 = vmatprep.subr.mxu0 0.0
        %349 = vmatpush1.msra.mxu0 0.0
        %350 = vmatprep.subr.mxu0 0.0
        %351 = vmatpush1.msra.mxu0 0.0
        %352 = vmatprep.subr.mxu0 0.0
        %353 = vmatpush1.msra.mxu0 0.0
        %354 = vmatprep.subr.mxu0 0.0
        %355 = vmatpush1.msra.mxu0 0.0
        %356 = vmatprep.subr.mxu0 0.0
        %357 = vmatpush1.msra.mxu0 0.0
        %358 = vmatprep.subr.mxu0 0.0
        %359 = vmatpush1.msra.mxu0 0.0
        %360 = vmatprep.subr.mxu0 0.0
        %361 = vmatpush1.msra.mxu0 0.0
        %362 = vmatprep.subr.mxu0 0.0
        %363 = vmatpush1.msra.mxu0 0.0
        %364 = vmatprep.subr.mxu0 0.0
        %365 = vmatpush1.msra.mxu0 0.0
        %366 = vmatprep.subr.mxu0 0.0
        %367 = vmatpush1.msra.mxu0 0.0
        %368 = vmatprep.subr.mxu0 0.0
        %369 = vmatpush1.msra.mxu0 0.0
        %370 = vmatprep.subr.mxu0 0.0
        %371 = vmatpush1.msra.mxu0 0.0
        %372 = vmatprep.subr.mxu0 0.0
        %373 = vmatpush1.msra.mxu0 0.0
        %374 = vmatprep.subr.mxu0 0.0
        %375 = vmatpush1.msra.mxu0 0.0
        %376 = vmatprep.subr.mxu0 0.0
        %377 = vmatpush1.msra.mxu0 0.0
        %378 = vmatprep.subr.mxu0 0.0
        %379 = vmatpush1.msra.mxu0 0.0
        %380 = vmatprep.mubr.f32.mxu0 0.0
        %381 = vmatmul.mubr.f32.gmra.mrb[0].mxu0 %v305
        %v382 = vpop.f32.mrb[0].mxu0
        %v383 = vadd.f32 %v286, %v382
        %v384 = vpop.f32.mrb[0].mxu0
        %v385 = vadd.f32 %v286, %v384
        %386 = vmatprep.mubr.f32.mxu0 0.0
        %387 = vmatmul.mubr.f32.gmra.mrb[0].mxu0 %v308
        %v388 = vpop.f32.mrb[0].mxu0
        %v389 = vadd.f32 %v291, %v388
        %v390 = vpop.f32.mrb[0].mxu0
        %v391 = vadd.f32 %v291, %v390
        %392 = vmatprep.mubr.f32.mxu0 0.0
        %393 = vmatmul.mubr.f32.gmra.mrb[0].mxu0 %v311
        %v394 = vpop.f32.mrb[0].mxu0
        %v395 = vadd.f32 %v296, %v394
        %v396 = vpop.f32.mrb[0].mxu0
        %v397 = vadd.f32 %v296, %v396
        %398 = vmatprep.mubr.f32.mxu0 0.0
        %399 = vmatmul.mubr.f32.gmra.mrb[0].mxu0 %v314
        %v400 = vpop.f32.mrb[0].mxu0
        %v401 = vadd.f32 %v301, %v400
        %v402 = vpop.f32.mrb[0].mxu0
        %v403 = vadd.f32 %v301, %v402
        %404 = vdwg.mxu0
        %vm405 = vcmp.ge.f32.partialorder %v383, 0.0
        %vm406 = vcmp.ge.f32.partialorder %v385, 0.0
        %vm407 = vcmp.ge.f32.partialorder %v389, 0.0
        %vm408 = vcmp.ge.f32.partialorder %v391, 0.0
        %vm409 = vcmp.ge.f32.partialorder %v395, 0.0
        %vm410 = vcmp.ge.f32.partialorder %v397, 0.0
        %vm411 = vcmp.ge.f32.partialorder %v401, 0.0
        %vm412 = vcmp.ge.f32.partialorder %v403, 0.0
        %v413 = vstv %s281
        %v414 = vmul.f32 %v413, %v383
        %v415 = vmul.f32 %v413, %v385
        %v416 = vmul.f32 %v413, %v389
        %v417 = vmul.f32 %v413, %v391
        %v418 = vmul.f32 %v413, %v395
        %v419 = vmul.f32 %v413, %v397
        %v420 = vmul.f32 %v413, %v401
        %v421 = vmul.f32 %v413, %v403
        %v422 = vsel %vm405, %v383, %v414
        %v423 = vsel %vm406, %v385, %v415
        %v424 = vsel %vm407, %v389, %v416
        %v425 = vsel %vm408, %v391, %v417
        %v426 = vsel %vm409, %v395, %v418
        %v427 = vsel %vm410, %v397, %v419
        %v428 = vsel %vm411, %v401, %v420
        %v429 = vsel %vm412, %v403, %v421
        %v430 = vsel %vm267, %v422, 0.0
        %v431 = vsel %vm268, %v423, 0.0
        %v432 = vsel %vm267, %v424, 0.0
        %v433 = vsel %vm268, %v425, 0.0
        %v434 = vsel %vm267, %v426, 0.0
        %v435 = vsel %vm268, %v427, 0.0
        %v436 = vsel %vm267, %v428, 0.0
        %v437 = vsel %vm268, %v429, 0.0
        %v438 = vadd.f32 %v430, %v431
        %v439 = vadd.f32 %v438, %v432
        %v440 = vadd.f32 %v439, %v433
        %v441 = vadd.f32 %v440, %v434
        %v442 = vadd.f32 %v441, %v435
        %v443 = vadd.f32 %v442, %v436
        %v444 = vadd.f32 %v443, %v437
        %445 = vadd.xlane.f32.xlu0 %v444
        %v446 = vpop.xlane.xlu0 %445
        %v447 = vrot.slane %v446, 4
        %v448 = vadd.f32 %v446, %v447
        %v449 = vrot.slane %v448, 2
        %v450 = vadd.f32 %v448, %v449
        %v451 = vrot.slane %v450, 1
        %v452 = vadd.f32 %v450, %v451
        %s453 = vtos %v452
        %v454 = vmul.f32 %v430, %v430
        %v455 = vmul.f32 %v431, %v431
        %v456 = vmul.f32 %v432, %v432
        %v457 = vmul.f32 %v433, %v433
        %v458 = vmul.f32 %v434, %v434
        %v459 = vmul.f32 %v435, %v435
        %v460 = vmul.f32 %v436, %v436
        %v461 = vmul.f32 %v437, %v437
        %v462 = vadd.f32 %v454, %v455
        %v463 = vadd.f32 %v462, %v456
        %v464 = vadd.f32 %v463, %v457
        %v465 = vadd.f32 %v464, %v458
        %v466 = vadd.f32 %v465, %v459
        %v467 = vadd.f32 %v466, %v460
        %v468 = vadd.f32 %v467, %v461
        %469 = vadd.xlane.f32.xlu0 %v468
        %v470 = vpop.xlane.xlu0 %469
        %v471 = vrot.slane %v470, 4
        %v472 = vadd.f32 %v470, %v471
        %v473 = vrot.slane %v472, 2
        %v474 = vadd.f32 %v472, %v473
        %v475 = vrot.slane %v474, 1
        %v476 = vadd.f32 %v474, %v475
        %s477 = vtos %v476
        %s478 = smul.f32 %s453, 0.00015625
        %s479 = smul.f32 %s477, 0.00015625
        %s480 = smul.f32 %s478, %s478
        %s481 = ssub.f32 %s479, %s480
        %s482 = sadd.f32 %s481, 1e-05
        %v483 = vstv %s482
        %v484 = vrsqrt.pop %v483
        %s485 = vtos %v484
        %v486 = vstv %s478
        %v487 = vsub.f32 %v430, %v486
        %v488 = vsub.f32 %v431, %v486
        %v489 = vsub.f32 %v432, %v486
        %v490 = vsub.f32 %v433, %v486
        %v491 = vsub.f32 %v434, %v486
        %v492 = vsub.f32 %v435, %v486
        %v493 = vsub.f32 %v436, %v486
        %v494 = vsub.f32 %v437, %v486
        %v495 = vstv %s485
        %v496 = vmul.f32 %v487, %v495
        %v497 = vmul.f32 %v488, %v495
        %v498 = vmul.f32 %v489, %v495
        %v499 = vmul.f32 %v490, %v495
        %v500 = vmul.f32 %v491, %v495
        %v501 = vmul.f32 %v492, %v495
        %v502 = vmul.f32 %v493, %v495
        %v503 = vmul.f32 %v494, %v495
        %504 = vset.pattern.permute.xlu0 1
        %505 = vperm.xlu0 %504, %v277
        %v506 = vpop.permute.xlu0 %505
        %508 = vset.pattern.permute.xlu0 1
        %509 = vperm.xlu0 %508, %v278
        %v510 = vpop.permute.xlu0 %509
        %512 = vset.pattern.permute.xlu0 1
        %513 = vperm.xlu0 %512, %v279
        %v514 = vpop.permute.xlu0 %513
        %516 = vset.pattern.permute.xlu0 1
        %517 = vperm.xlu0 %516, %v280
        %v518 = vpop.permute.xlu0 %517
        %v520 = vmul.f32 %v506, %v496
        %v521 = vmul.f32 %v506, %v497
        %v522 = vmul.f32 %v510, %v498
        %v523 = vmul.f32 %v510, %v499
        %v524 = vmul.f32 %v514, %v500
        %v525 = vmul.f32 %v514, %v501
        %v526 = vmul.f32 %v518, %v502
        %v527 = vmul.f32 %v518, %v503
        %528 = vset.pattern.permute.xlu0 2
        %529 = vperm.xlu0 %528, %v277
        %v530 = vpop.permute.xlu0 %529
        %532 = vset.pattern.permute.xlu0 2
        %533 = vperm.xlu0 %532, %v278
        %v534 = vpop.permute.xlu0 %533
        %536 = vset.pattern.permute.xlu0 2
        %537 = vperm.xlu0 %536, %v279
        %v538 = vpop.permute.xlu0 %537
        %540 = vset.pattern.permute.xlu0 2
        %541 = vperm.xlu0 %540, %v280
        %v542 = vpop.permute.xlu0 %541
        %v544 = vadd.f32 %v520, %v530
        %v545 = vadd.f32 %v521, %v530
        %v546 = vadd.f32 %v522, %v534
        %v547 = vadd.f32 %v523, %v534
        %v548 = vadd.f32 %v524, %v538
        %v549 = vadd.f32 %v525, %v538
        %v550 = vadd.f32 %v526, %v542
        %v551 = vadd.f32 %v527, %v542
        %v552 = vsel %vm267, %v544, 0.0
        %v553 = vsel %vm268, %v545, 0.0
        %v554 = vsel %vm267, %v546, 0.0
        %v555 = vsel %vm268, %v547, 0.0
        %v556 = vsel %vm267, %v548, 0.0
        %v557 = vsel %vm268, %v549, 0.0
        %v558 = vsel %vm267, %v550, 0.0
        %v559 = vsel %vm268, %v551, 0.0
        %560 = vrot.lane.b32.xlu0 %v552, 2
        %v561 = vpop.permute.xlu0 %560
        %562 = vrot.lane.b32.xlu0 %v554, 2
        %v563 = vpop.permute.xlu0 %562
        %564 = vrot.lane.b32.xlu0 %v556, 2
        %v565 = vpop.permute.xlu0 %564
        %566 = vrot.lane.b32.xlu0 %v558, 2
        %v567 = vpop.permute.xlu0 %566
        %568 = vrot.lane.b32.xlu0 %v553, 2
        %v569 = vpop.permute.xlu0 %568
        %570 = vrot.lane.b32.xlu0 %v555, 2
        %v571 = vpop.permute.xlu0 %570
        %572 = vrot.lane.b32.xlu0 %v557, 2
        %v573 = vpop.permute.xlu0 %572
        %574 = vrot.lane.b32.xlu0 %v559, 2
        %v575 = vpop.permute.xlu0 %574
        %vm576 = vcmp.lt.s32.totalorder %v265, 2
        %v577 = vsel %vm576, %v561, %v569
        %v578 = vsel %vm576, %v563, %v571
        %v579 = vsel %vm576, %v565, %v573
        %v580 = vsel %vm576, %v567, %v575
        %v581 = vsel %vm576, %v569, %v561
        %v582 = vsel %vm576, %v571, %v563
        %v583 = vsel %vm576, %v573, %v565
        %v584 = vsel %vm576, %v575, %v567
        %vm585 = vcmp.ge.s32.totalorder %v265, 2
        %vm586 = vcmp.ge.s32.totalorder %v266, 2
        %v587 = vsel %vm585, %v581, 0.0
        %v588 = vsel %vm586, %v577, 0.0
        %v589 = vsel %vm585, %v582, 0.0
        %v590 = vsel %vm586, %v578, 0.0
        %v591 = vsel %vm585, %v583, 0.0
        %v592 = vsel %vm586, %v579, 0.0
        %v593 = vsel %vm585, %v584, 0.0
        %v594 = vsel %vm586, %v580, 0.0
        %595 = vset.pattern.permute.xlu0 6
        %596 = vperm.xlu0 %595, %v277
        %v597 = vpop.permute.xlu0 %596
        %599 = vset.pattern.permute.xlu0 6
        %600 = vperm.xlu0 %599, %v278
        %v601 = vpop.permute.xlu0 %600
        %603 = vset.pattern.permute.xlu0 6
        %604 = vperm.xlu0 %603, %v279
        %v605 = vpop.permute.xlu0 %604
        %607 = vset.pattern.permute.xlu0 6
        %608 = vperm.xlu0 %607, %v280
        %v609 = vpop.permute.xlu0 %608
        %v611 = vmul.f32 %v597, %v587
        %v612 = vmul.f32 %v597, %v588
        %v613 = vmul.f32 %v601, %v589
        %v614 = vmul.f32 %v601, %v590
        %v615 = vmul.f32 %v605, %v591
        %v616 = vmul.f32 %v605, %v592
        %v617 = vmul.f32 %v609, %v593
        %v618 = vmul.f32 %v609, %v594
        %v619 = vadd.f32 %v611, 0.0
        %v620 = vadd.f32 %v612, 0.0
        %v621 = vadd.f32 %v613, 0.0
        %v622 = vadd.f32 %v614, 0.0
        %v623 = vadd.f32 %v615, 0.0
        %v624 = vadd.f32 %v616, 0.0
        %v625 = vadd.f32 %v617, 0.0
        %v626 = vadd.f32 %v618, 0.0
        %627 = vset.pattern.permute.xlu0 7
        %628 = vperm.xlu0 %627, %v277
        %v629 = vpop.permute.xlu0 %628
        %631 = vset.pattern.permute.xlu0 7
        %632 = vperm.xlu0 %631, %v278
        %v633 = vpop.permute.xlu0 %632
        %635 = vset.pattern.permute.xlu0 7
        %636 = vperm.xlu0 %635, %v279
        %v637 = vpop.permute.xlu0 %636
        %639 = vset.pattern.permute.xlu0 7
        %640 = vperm.xlu0 %639, %v280
        %v641 = vpop.permute.xlu0 %640
        %v643 = vmul.f32 %v629, %v552
        %v644 = vmul.f32 %v629, %v553
        %v645 = vmul.f32 %v633, %v554
        %v646 = vmul.f32 %v633, %v555
        %v647 = vmul.f32 %v637, %v556
        %v648 = vmul.f32 %v637, %v557
        %v649 = vmul.f32 %v641, %v558
        %v650 = vmul.f32 %v641, %v559
        %v651 = vadd.f32 %v619, %v643
        %v652 = vadd.f32 %v620, %v644
        %v653 = vadd.f32 %v621, %v645
        %v654 = vadd.f32 %v622, %v646
        %v655 = vadd.f32 %v623, %v647
        %v656 = vadd.f32 %v624, %v648
        %v657 = vadd.f32 %v625, %v649
        %v658 = vadd.f32 %v626, %v650
        %659 = vrot.lane.b32.xlu0 %v552, 126
        %v660 = vpop.permute.xlu0 %659
        %661 = vrot.lane.b32.xlu0 %v554, 126
        %v662 = vpop.permute.xlu0 %661
        %663 = vrot.lane.b32.xlu0 %v556, 126
        %v664 = vpop.permute.xlu0 %663
        %665 = vrot.lane.b32.xlu0 %v558, 126
        %v666 = vpop.permute.xlu0 %665
        %667 = vrot.lane.b32.xlu0 %v553, 126
        %v668 = vpop.permute.xlu0 %667
        %669 = vrot.lane.b32.xlu0 %v555, 126
        %v670 = vpop.permute.xlu0 %669
        %671 = vrot.lane.b32.xlu0 %v557, 126
        %v672 = vpop.permute.xlu0 %671
        %673 = vrot.lane.b32.xlu0 %v559, 126
        %v674 = vpop.permute.xlu0 %673
        %vm675 = vcmp.lt.s32.totalorder %v265, 126
        %v676 = vsel %vm675, %v660, %v668
        %v677 = vsel %vm675, %v662, %v670
        %v678 = vsel %vm675, %v664, %v672
        %v679 = vsel %vm675, %v666, %v674
        %v680 = vsel %vm675, %v668, %v660
        %v681 = vsel %vm675, %v670, %v662
        %v682 = vsel %vm675, %v672, %v664
        %v683 = vsel %vm675, %v674, %v666
        %vm684 = vcmp.lt.s32.totalorder %v265, 198
        %vm685 = vcmp.lt.s32.totalorder %v266, 198
        %v686 = vsel %vm684, %v676, 0.0
        %v687 = vsel %vm685, %v680, 0.0
        %v688 = vsel %vm684, %v677, 0.0
        %v689 = vsel %vm685, %v681, 0.0
        %v690 = vsel %vm684, %v678, 0.0
        %v691 = vsel %vm685, %v682, 0.0
        %v692 = vsel %vm684, %v679, 0.0
        %v693 = vsel %vm685, %v683, 0.0
        %694 = vset.pattern.permute.xlu0 8
        %695 = vperm.xlu0 %694, %v277
        %v696 = vpop.permute.xlu0 %695
        %698 = vset.pattern.permute.xlu0 8
        %699 = vperm.xlu0 %698, %v278
        %v700 = vpop.permute.xlu0 %699
        %702 = vset.pattern.permute.xlu0 8
        %703 = vperm.xlu0 %702, %v279
        %v704 = vpop.permute.xlu0 %703
        %706 = vset.pattern.permute.xlu0 8
        %707 = vperm.xlu0 %706, %v280
        %v708 = vpop.permute.xlu0 %707
        %v710 = vmul.f32 %v696, %v686
        %v711 = vmul.f32 %v696, %v687
        %v712 = vmul.f32 %v700, %v688
        %v713 = vmul.f32 %v700, %v689
        %v714 = vmul.f32 %v704, %v690
        %v715 = vmul.f32 %v704, %v691
        %v716 = vmul.f32 %v708, %v692
        %v717 = vmul.f32 %v708, %v693
        %v718 = vadd.f32 %v651, %v710
        %v719 = vadd.f32 %v652, %v711
        %v720 = vadd.f32 %v653, %v712
        %v721 = vadd.f32 %v654, %v713
        %v722 = vadd.f32 %v655, %v714
        %v723 = vadd.f32 %v656, %v715
        %v724 = vadd.f32 %v657, %v716
        %v725 = vadd.f32 %v658, %v717
        %726 = vset.pattern.permute.xlu0 3
        %727 = vperm.xlu0 %726, %v277
        %v728 = vpop.permute.xlu0 %727
        %730 = vset.pattern.permute.xlu0 3
        %731 = vperm.xlu0 %730, %v278
        %v732 = vpop.permute.xlu0 %731
        %734 = vset.pattern.permute.xlu0 3
        %735 = vperm.xlu0 %734, %v279
        %v736 = vpop.permute.xlu0 %735
        %738 = vset.pattern.permute.xlu0 3
        %739 = vperm.xlu0 %738, %v280
        %v740 = vpop.permute.xlu0 %739
        %v742 = vadd.f32 %v718, %v728
        %v743 = vadd.f32 %v719, %v728
        %v744 = vadd.f32 %v720, %v732
        %v745 = vadd.f32 %v721, %v732
        %v746 = vadd.f32 %v722, %v736
        %v747 = vadd.f32 %v723, %v736
        %v748 = vadd.f32 %v724, %v740
        %v749 = vadd.f32 %v725, %v740
        %vm750 = vcmp.ge.f32.partialorder %v742, 0.0
        %vm751 = vcmp.ge.f32.partialorder %v743, 0.0
        %vm752 = vcmp.ge.f32.partialorder %v744, 0.0
        %vm753 = vcmp.ge.f32.partialorder %v745, 0.0
        %vm754 = vcmp.ge.f32.partialorder %v746, 0.0
        %vm755 = vcmp.ge.f32.partialorder %v747, 0.0
        %vm756 = vcmp.ge.f32.partialorder %v748, 0.0
        %vm757 = vcmp.ge.f32.partialorder %v749, 0.0
        %v758 = vstv %s282
        %v759 = vmul.f32 %v758, %v742
        %v760 = vmul.f32 %v758, %v743
        %v761 = vmul.f32 %v758, %v744
        %v762 = vmul.f32 %v758, %v745
        %v763 = vmul.f32 %v758, %v746
        %v764 = vmul.f32 %v758, %v747
        %v765 = vmul.f32 %v758, %v748
        %v766 = vmul.f32 %v758, %v749
        %v767 = vsel %vm750, %v742, %v759
        %v768 = vsel %vm751, %v743, %v760
        %v769 = vsel %vm752, %v744, %v761
        %v770 = vsel %vm753, %v745, %v762
        %v771 = vsel %vm754, %v746, %v763
        %v772 = vsel %vm755, %v747, %v764
        %v773 = vsel %vm756, %v748, %v765
        %v774 = vsel %vm757, %v749, %v766
        %v775 = vsel %vm267, %v767, 0.0
        %v776 = vsel %vm268, %v768, 0.0
        %v777 = vsel %vm267, %v769, 0.0
        %v778 = vsel %vm268, %v770, 0.0
        %v779 = vsel %vm267, %v771, 0.0
        %v780 = vsel %vm268, %v772, 0.0
        %v781 = vsel %vm267, %v773, 0.0
        %v782 = vsel %vm268, %v774, 0.0
        %v783 = vadd.f32 %v775, %v776
        %v784 = vadd.f32 %v783, %v777
        %v785 = vadd.f32 %v784, %v778
        %v786 = vadd.f32 %v785, %v779
        %v787 = vadd.f32 %v786, %v780
        %v788 = vadd.f32 %v787, %v781
        %v789 = vadd.f32 %v788, %v782
        %790 = vadd.xlane.f32.xlu0 %v789
        %v791 = vpop.xlane.xlu0 %790
        %v792 = vrot.slane %v791, 4
        %v793 = vadd.f32 %v791, %v792
        %v794 = vrot.slane %v793, 2
        %v795 = vadd.f32 %v793, %v794
        %v796 = vrot.slane %v795, 1
        %v797 = vadd.f32 %v795, %v796
        %s798 = vtos %v797
        %v799 = vmul.f32 %v775, %v775
        %v800 = vmul.f32 %v776, %v776
        %v801 = vmul.f32 %v777, %v777
        %v802 = vmul.f32 %v778, %v778
        %v803 = vmul.f32 %v779, %v779
        %v804 = vmul.f32 %v780, %v780
        %v805 = vmul.f32 %v781, %v781
        %v806 = vmul.f32 %v782, %v782
        %v807 = vadd.f32 %v799, %v800
        %v808 = vadd.f32 %v807, %v801
        %v809 = vadd.f32 %v808, %v802
        %v810 = vadd.f32 %v809, %v803
        %v811 = vadd.f32 %v810, %v804
        %v812 = vadd.f32 %v811, %v805
        %v813 = vadd.f32 %v812, %v806
        %814 = vadd.xlane.f32.xlu0 %v813
        %v815 = vpop.xlane.xlu0 %814
        %v816 = vrot.slane %v815, 4
        %v817 = vadd.f32 %v815, %v816
        %v818 = vrot.slane %v817, 2
        %v819 = vadd.f32 %v817, %v818
        %v820 = vrot.slane %v819, 1
        %v821 = vadd.f32 %v819, %v820
        %s822 = vtos %v821
        %s823 = smul.f32 %s798, 0.00015625
        %s824 = smul.f32 %s822, 0.00015625
        %s825 = smul.f32 %s823, %s823
        %s826 = ssub.f32 %s824, %s825
        %s827 = sadd.f32 %s826, 1e-05
        %v828 = vstv %s827
        %v829 = vrsqrt.pop %v828
        %s830 = vtos %v829
        %v831 = vstv %s823
        %v832 = vsub.f32 %v775, %v831
        %v833 = vsub.f32 %v776, %v831
        %v834 = vsub.f32 %v777, %v831
        %v835 = vsub.f32 %v778, %v831
        %v836 = vsub.f32 %v779, %v831
        %v837 = vsub.f32 %v780, %v831
        %v838 = vsub.f32 %v781, %v831
        %v839 = vsub.f32 %v782, %v831
        %v840 = vstv %s830
        %v841 = vmul.f32 %v832, %v840
        %v842 = vmul.f32 %v833, %v840
        %v843 = vmul.f32 %v834, %v840
        %v844 = vmul.f32 %v835, %v840
        %v845 = vmul.f32 %v836, %v840
        %v846 = vmul.f32 %v837, %v840
        %v847 = vmul.f32 %v838, %v840
        %v848 = vmul.f32 %v839, %v840
        %849 = vset.pattern.permute.xlu0 4
        %850 = vperm.xlu0 %849, %v277
        %v851 = vpop.permute.xlu0 %850
        %853 = vset.pattern.permute.xlu0 4
        %854 = vperm.xlu0 %853, %v278
        %v855 = vpop.permute.xlu0 %854
        %857 = vset.pattern.permute.xlu0 4
        %858 = vperm.xlu0 %857, %v279
        %v859 = vpop.permute.xlu0 %858
        %861 = vset.pattern.permute.xlu0 4
        %862 = vperm.xlu0 %861, %v280
        %v863 = vpop.permute.xlu0 %862
        %v865 = vmul.f32 %v851, %v841
        %v866 = vmul.f32 %v851, %v842
        %v867 = vmul.f32 %v855, %v843
        %v868 = vmul.f32 %v855, %v844
        %v869 = vmul.f32 %v859, %v845
        %v870 = vmul.f32 %v859, %v846
        %v871 = vmul.f32 %v863, %v847
        %v872 = vmul.f32 %v863, %v848
        %873 = vset.pattern.permute.xlu0 5
        %874 = vperm.xlu0 %873, %v277
        %v875 = vpop.permute.xlu0 %874
        %877 = vset.pattern.permute.xlu0 5
        %878 = vperm.xlu0 %877, %v278
        %v879 = vpop.permute.xlu0 %878
        %881 = vset.pattern.permute.xlu0 5
        %882 = vperm.xlu0 %881, %v279
        %v883 = vpop.permute.xlu0 %882
        %885 = vset.pattern.permute.xlu0 5
        %886 = vperm.xlu0 %885, %v280
        %v887 = vpop.permute.xlu0 %886
        %v889 = vadd.f32 %v865, %v875
        %v890 = vadd.f32 %v866, %v875
        %v891 = vadd.f32 %v867, %v879
        %v892 = vadd.f32 %v868, %v879
        %v893 = vadd.f32 %v869, %v883
        %v894 = vadd.f32 %v870, %v883
        %v895 = vadd.f32 %v871, %v887
        %v896 = vadd.f32 %v872, %v887
        %v897 = vld [vmem:[%s2] sm:$0xff]
        %v898 = vld [vmem:[%s2 + $0x8] sm:$0xff]
        %v899 = vld [vmem:[%s3] sm:$0xff]
        %v900 = vld [vmem:[%s3 + $0x8] sm:$0xff]
        %902 = vset.pattern.permute.xlu0 0
        %903 = vperm.xlu0 %902, %v899
        %v904 = vpop.permute.xlu0 %903
        %907 = vset.pattern.permute.xlu0 0
        %908 = vperm.xlu0 %907, %v900
        %v909 = vpop.permute.xlu0 %908
        %vm911 = vcmask 261120
        %v913 = vsel %vm911, %v897, 0
        %v916 = vsel %vm911, %v898, 0
        %918 = vmatprep.subr.mxu0 %v890
        %919 = vmatpush1.msra.mxu0 %v889
        %920 = vmatprep.subr.mxu0 %v892
        %921 = vmatpush1.msra.mxu0 %v891
        %922 = vmatprep.subr.mxu0 %v894
        %923 = vmatpush1.msra.mxu0 %v893
        %924 = vmatprep.subr.mxu0 %v896
        %925 = vmatpush1.msra.mxu0 %v895
        %926 = vmatprep.subr.mxu0 0.0
        %927 = vmatpush1.msra.mxu0 0.0
        %928 = vmatprep.subr.mxu0 0.0
        %929 = vmatpush1.msra.mxu0 0.0
        %930 = vmatprep.subr.mxu0 0.0
        %931 = vmatpush1.msra.mxu0 0.0
        %932 = vmatprep.subr.mxu0 0.0
        %933 = vmatpush1.msra.mxu0 0.0
        %934 = vmatprep.subr.mxu0 0.0
        %935 = vmatpush1.msra.mxu0 0.0
        %936 = vmatprep.subr.mxu0 0.0
        %937 = vmatpush1.msra.mxu0 0.0
        %938 = vmatprep.subr.mxu0 0.0
        %939 = vmatpush1.msra.mxu0 0.0
        %940 = vmatprep.subr.mxu0 0.0
        %941 = vmatpush1.msra.mxu0 0.0
        %942 = vmatprep.subr.mxu0 0.0
        %943 = vmatpush1.msra.mxu0 0.0
        %944 = vmatprep.subr.mxu0 0.0
        %945 = vmatpush1.msra.mxu0 0.0
        %946 = vmatprep.subr.mxu0 0.0
        %947 = vmatpush1.msra.mxu0 0.0
        %948 = vmatprep.subr.mxu0 0.0
        %949 = vmatpush1.msra.mxu0 0.0
        %950 = vmatprep.subr.mxu0 0.0
        %951 = vmatpush1.msra.mxu0 0.0
        %952 = vmatprep.subr.mxu0 0.0
        %953 = vmatpush1.msra.mxu0 0.0
        %954 = vmatprep.subr.mxu0 0.0
        %955 = vmatpush1.msra.mxu0 0.0
        %956 = vmatprep.subr.mxu0 0.0
        %957 = vmatpush1.msra.mxu0 0.0
        %958 = vmatprep.subr.mxu0 0.0
        %959 = vmatpush1.msra.mxu0 0.0
        %960 = vmatprep.subr.mxu0 0.0
        %961 = vmatpush1.msra.mxu0 0.0
        %962 = vmatprep.subr.mxu0 0.0
        %963 = vmatpush1.msra.mxu0 0.0
        %964 = vmatprep.subr.mxu0 0.0
        %965 = vmatpush1.msra.mxu0 0.0
        %966 = vmatprep.subr.mxu0 0.0
        %967 = vmatpush1.msra.mxu0 0.0
        %968 = vmatprep.subr.mxu0 0.0
        %969 = vmatpush1.msra.mxu0 0.0
        %970 = vmatprep.subr.mxu0 0.0
        %971 = vmatpush1.msra.mxu0 0.0
        %972 = vmatprep.subr.mxu0 0.0
        %973 = vmatpush1.msra.mxu0 0.0
        %974 = vmatprep.subr.mxu0 0.0
        %975 = vmatpush1.msra.mxu0 0.0
        %976 = vmatprep.subr.mxu0 0.0
        %977 = vmatpush1.msra.mxu0 0.0
        %978 = vmatprep.subr.mxu0 0.0
        %979 = vmatpush1.msra.mxu0 0.0
        %980 = vmatprep.subr.mxu0 0.0
        %981 = vmatpush1.msra.mxu0 0.0
        %982 = vmatprep.mubr.f32.mxu0 0.0
        %983 = vmatmul.mubr.f32.gmra.mrb[0].mxu0 %v913
        %v984 = vpop.f32.mrb[0].mxu0
        %v985 = vadd.f32 %v904, %v984
        %v986 = vpop.f32.mrb[0].mxu0
        %v987 = vadd.f32 %v904, %v986
        %988 = vmatprep.mubr.f32.mxu0 0.0
        %989 = vmatmul.mubr.f32.gmra.mrb[0].mxu0 %v916
        %v990 = vpop.f32.mrb[0].mxu0
        %v991 = vadd.f32 %v909, %v990
        %v992 = vpop.f32.mrb[0].mxu0
        %v993 = vadd.f32 %v909, %v992
        %994 = vdwg.mxu0
        %v995 = vadd.f32 %v985, %v273
        %v996 = vadd.f32 %v987, %v274
        %v997 = vadd.f32 %v991, %v275
        %v998 = vadd.f32 %v993, %v276
        %999 = vst [vmem:[%s258] sm:$0xff] %v995
        %1000 = vst [vmem:[%s258 + $0x8] sm:$0xff] %v996
        %1001 = vst [vmem:[%s258 + $0x10] sm:$0xff] %v997
        %1002 = vst [vmem:[%s258 + $0x18] sm:$0xff] %v998
        %s1003 = sand.u32 %s160, 1
        %s1004 = scalar_lea.sflag [#allocation3], %s1003
        %s1005 = sand.u32 %s160, 1
        %s1006 = smul.addr %s1005, 32
        %s1007 = scalar_lea.vmem [#allocation5], %s1006
        // Predicated region
        $region49: #{tpu_custom_call.1} parent=43 // pred_check
          %p1008 = pneg %p170
        $region50: #{tpu_custom_call.1} parent=43 // pred_check_branch
          %1010 = sbr.rel (%p1008) target = $region52
        $region51: #{tpu_custom_call.1} parent=43 // pred_region
          %s1012 = ssub.s32 512, 512
          %1013 = vsyncadd %s1004, %s1012
          %s1014 = smul.addr %s21, 4
          %s1015 = smul.addr %s1014, 128
          %s1016 = scalar_lea.hbm %s6, %s1015
          %s1017 = sshll.u32 %s1007, 4
          %s1018 = int_to_ptr.vmem [resolvable:$true] %s1017
          %1023 = dma.vmem_to_hbm [thread:$0]  %s1018, 512, %s1016, %s1004, 256, 256, 16
        $region52: #{tpu_custom_call.1} parent=43 // pred_fallthru
          _
      $region44: #{tpu_custom_call.1} parent=5 // pred_fallthru
        _
      %p1024 = scmp.le.s32.totalorder 2, %s16
      // Predicated region
      $region53: #{tpu_custom_call.1} parent=5 // pred_check
        %p1025 = pneg %p1024
      $region54: #{tpu_custom_call.1} parent=5 // pred_check_branch
        %1027 = sbr.rel (%p1025) target = $region56
      $region55: #{tpu_custom_call.1} parent=5 // pred_region
        %s1028 = ssub.s32 %s16, 2
        // Predicated region
        $region57: #{tpu_custom_call.1} parent=55 // pred_check
          %p1029 = pneg %p176
        $region58: #{tpu_custom_call.1} parent=55 // pred_check_branch
          %1031 = sbr.rel (%p1029) target = $region60
        $region59: #{tpu_custom_call.1} parent=55 // pred_region
          %s1032 = sand.u32 %s161, 1
          %s1033 = scalar_lea.sflag [#allocation3], %s1032
          %s1034 = sand.u32 %s161, 1
          %s1035 = smul.addr %s1034, 32
          %s1036 = scalar_lea.vmem [#allocation5], %s1035
          %1037 = dma.done %s1033, 512
        $region60: #{tpu_custom_call.1} parent=55 // pred_fallthru
          _
      $region56: #{tpu_custom_call.1} parent=5 // pred_fallthru
        _
    $region6: #{tpu_custom_call.1} parent=1 // loop_footer
      %s20 = sadd.s32 1, %s16
    $region7: #{tpu_custom_call.1} parent=1 // loop_footer_branch
      %15 = sbr.rel target = $region3
    $region8: #{tpu_custom_call.1} parent=1 // loop_exit
      _
    %1038 = vsyncpa [#allocation3], 1
    %s1039 = scalar_lea.sflag [#allocation3], 1
    %1040 = vsyncpa %s1039, 1
    %1041 = vsyncpa [#allocation4], 1
    %s1042 = scalar_lea.sflag [#allocation4], 1
    %1043 = vsyncpa %s1042, 1

</llo_original>
